<compile_context>
chip_gen: v7x
topology: tpu7x:2x2x1
jax: 0.10.0
libtpu: 0.0.40
codegen_flags: <defaults>
</compile_context>

<pallas_src>
import functools

import jax
import jax.numpy as jnp
import numpy as np
from jax.experimental import pallas as pl
from jax.experimental.pallas import tpu as pltpu

EPS = 1e-6
_F32 = jnp.float32


def _dice_partial_kernel(x_ref, t_ref, inter_ref, denom_ref, *,
                         use_sigmoid, tile_r, blocks_per_split, total_rows,
                         needs_mask, sublane_pack):
    # x_ref/t_ref blocks:        (1, C, tile_r, 128)
    # inter_ref/denom_ref blocks (1, 1, C, acc_sub, 128), resident across the
    # row-block grid axis (index_map constant in j) -> accumulators.
    s = pl.program_id(1)
    j = pl.program_id(2)

    @pl.when(j == 0)
    def _init():
        inter_ref[...] = jnp.zeros_like(inter_ref)
        denom_ref[...] = jnp.zeros_like(denom_ref)

    x = x_ref[0].astype(_F32)          # (C, tile_r, 128)
    t = t_ref[0].astype(_F32)          # (C, tile_r, 128)

    if use_sigmoid:
        p = jax.nn.sigmoid(x)                          # nn.Sigmoid()
    else:
        # nn.Softmax(dim=1): softmax over the channel axis (axis 0 here).
        m = jnp.max(x, axis=0, keepdims=True)
        e = jnp.exp(x - m)
        p = e / jnp.sum(e, axis=0, keepdims=True)      # exact divide

    n_ch = p.shape[0]

    def accumulate(pb, tb):
        inter = pb * tb
        denom = pb * pb + tb * tb                      # fused psum + tsum
        if sublane_pack:
            # (C, tile_r, 128) -> (C, tile_r//8, 8, 128); summing over axis 1
            # keeps the per-step reduction on full vregs (VALU only; the 8->1
            # sublane and cross-lane reduces are deferred to the epilogue).
            inter_ref[0, 0] += jnp.sum(
                inter.reshape(n_ch, tile_r // 8, 8, 128), axis=1)
            denom_ref[0, 0] += jnp.sum(
                denom.reshape(n_ch, tile_r // 8, 8, 128), axis=1)
        else:
            # Small-input fallback (tile_r not a multiple of 8): single-sublane
            # accumulator.
            inter_ref[0, 0] += jnp.sum(inter, axis=1, keepdims=True)
            denom_ref[0, 0] += jnp.sum(denom, axis=1, keepdims=True)

    if not needs_mask:
        # Every block fully valid: no masking anywhere in the hot loop.
        accumulate(p, t)
    else:
        start = (s * blocks_per_split + j) * tile_r
        valid = total_rows - start                     # valid rows in block

        @pl.when(valid >= tile_r)
        def _full():
            accumulate(p, t)

        @pl.when(jnp.logical_and(valid > 0, valid < tile_r))
        def _tail():
            row = jax.lax.broadcasted_iota(jnp.int32, p.shape, 1)
            keep = row < valid
            accumulate(jnp.where(keep, p, 0.0), jnp.where(keep, t, 0.0))


def _vmem_limit_bytes():
    """Generation-aware VMEM limit: ~3/4 of per-core VMEM, capped at 96 MiB."""
    cap = 128 * 1024 * 1024
    try:
        info = pltpu.get_tpu_info()
        cap = int(getattr(info, "vmem_capacity_bytes", cap))
    except Exception:
        pass
    return int(min(96 * 1024 * 1024, cap * 3 // 4))


def _auto_tile_rows(n_rows, n_ch, x_item, t_item, vmem_limit):
    # Headroom for resident accumulators + Mosaic internal scratch.
    usable = max(vmem_limit - 4 * 1024 * 1024, 4 * 1024 * 1024)
    # Per row of 128 lanes per grid step:
    #   2 pipeline buffers per input  +  ~5 block-sized f32 compute temporaries
    #   (f32 casts of x/t, p, p*t, p*p + t*t).
    per_row = n_ch * 128 * (2 * (x_item + t_item) + 5 * 4)
    max_rows = max(8, (usable // per_row) // 8 * 8)
    return int(n_rows) if n_rows <= max_rows else int(max_rows)


def dice_loss_pallas(x, target, *, weight=None, sigmoid_normalization=True,
                     tile_rows=None):
    """x, target: (B, C, H, W). target may be bf16/int (kernel upcasts) to
    narrow its HBM stream. Returns scalar f32 loss = 1 - mean_c(dice_c)."""
    B, C, H, W = x.shape
    assert target.shape == x.shape
    N = H * W

    # Free reshape of contiguous NCHW -> (B, C, N); no transpose, no copy.
    xf = x.reshape(B, C, N)
    tf = target.reshape(B, C, N)

    R = N // 128          # full 128-lane rows handled by the kernel
    tail = N - R * 128    # ragged remainder folded into the JAX epilogue

    inter_c = jnp.zeros((C,), _F32)
    denom_c = jnp.zeros((C,), _F32)

    if R > 0:
        # TODO(synk): when N % 128 != 0 the prefix slice costs one copy pass;
        # typical power-of-two segmentation shapes take the copy-free path.
        xr = xf if tail == 0 else xf[:, :, :R * 128]
        tr = tf if tail == 0 else tf[:, :, :R * 128]
        xr = xr.reshape(B, C, R, 128)
        tr = tr.reshape(B, C, R, 128)

        vmem_limit = _vmem_limit_bytes()
        if tile_rows is None:
            tile_rows = _auto_tile_rows(R, C, xr.dtype.itemsize,
                                        tr.dtype.itemsize, vmem_limit)
        tile_rows = int(min(int(tile_rows), R))
        if tile_rows < R:
            tile_rows = max(8, (tile_rows // 8) * 8)   # keep (8,128) tiling

        n_row_blocks = pl.cdiv(R, tile_rows)

        # Guarantee >=2 blocks on the parallel axes when B == 1 so both v7x
        # TensorCores get work; the epilogue sums everything, so it is free.
        n_splits = 1
        if B == 1 and n_row_blocks > 1:
            for d in (4, 2):
                if n_row_blocks % d == 0:
                    n_splits = d
                    break
        blocks_per_split = n_row_blocks // n_splits

        sublane_pack = (tile_rows % 8 == 0)
        acc_sub = 8 if sublane_pack else 1
        needs_mask = (R % tile_rows) != 0

        kernel = functools.partial(
            _dice_partial_kernel,
            use_sigmoid=sigmoid_normalization,
            tile_r=tile_rows,
            blocks_per_split=blocks_per_split,
            total_rows=R,
            needs_mask=needs_mask,
            sublane_pack=sublane_pack,
        )

        out_struct = jax.ShapeDtypeStruct((B, n_splits, C, acc_sub, 128), _F32)
        out_spec = pl.BlockSpec((1, 1, C, acc_sub, 128),
                                lambda b, s, j: (b, s, 0, 0, 0))
        in_spec = pl.BlockSpec(
            (1, C, tile_rows, 128),
            lambda b, s, j: (b, 0, s * blocks_per_split + j, 0))

        inter, denom = pl.pallas_call(
            kernel,
            out_shape=(out_struct, out_struct),
            grid_spec=pltpu.PrefetchScalarGridSpec(
                num_scalar_prefetch=0,
                grid=(B, n_splits, blocks_per_split),
                in_specs=[in_spec, in_spec],
                out_specs=(out_spec, out_spec),
            ),
            compiler_params=pltpu.CompilerParams(
                dimension_semantics=("parallel", "parallel", "arbitrary"),
                vmem_limit_bytes=vmem_limit,
            ),
        )(xr, tr)

        inter_c = jnp.sum(inter, axis=(0, 1, 3, 4))    # (C,)
        denom_c = jnp.sum(denom, axis=(0, 1, 3, 4))    # (C,)

    if tail > 0:
        # Ragged <128-element-per-(b, c) tail: tiny, handled in plain JAX.
        xt = xf[:, :, R * 128:].astype(_F32)
        tt = tf[:, :, R * 128:].astype(_F32)
        if sigmoid_normalization:
            pt = jax.nn.sigmoid(xt)
        else:
            pt = jax.nn.softmax(xt, axis=1)
        inter_c = inter_c + jnp.sum(pt * tt, axis=(0, 2))
        denom_c = denom_c + jnp.sum(pt * pt + tt * tt, axis=(0, 2))

    if weight is not None:
        inter_c = jnp.asarray(weight, _F32) * inter_c

    per_channel_dice = 2.0 * inter_c / jnp.maximum(denom_c, EPS)
    return 1.0 - jnp.mean(per_channel_dice)


def dice_loss_ref(x, target, *, weight=None, sigmoid_normalization=True):
    """Pure-JAX reference mirroring the PyTorch semantics."""
    if sigmoid_normalization:
        p = jax.nn.sigmoid(x)
    else:
        p = jax.nn.softmax(x, axis=1)
    C = x.shape[1]
    pf = jnp.transpose(p, (1, 0, 2, 3)).reshape(C, -1)
    tf = jnp.transpose(target, (1, 0, 2, 3)).reshape(C, -1).astype(jnp.float32)
    intersect = jnp.sum(pf * tf, axis=-1)
    if weight is not None:
        intersect = jnp.asarray(weight, jnp.float32) * intersect
    denom = jnp.maximum(jnp.sum(pf * pf, axis=-1) + jnp.sum(tf * tf, axis=-1),
                        EPS)
    return 1.0 - jnp.mean(2.0 * intersect / denom)


if __name__ == "__main__":
    root = jax.random.PRNGKey(0)

    def run_case(seed, shape, *, sigmoid=True, tile_rows=None,
                 target_dtype=jnp.float32):
        kx, kt = jax.random.split(jax.random.fold_in(root, seed))
        x = jax.random.normal(kx, shape, dtype=jnp.float32)
        t = jax.random.bernoulli(kt, 0.3, shape)
        loss = jax.block_until_ready(
            dice_loss_pallas(x, t.astype(target_dtype),
                             sigmoid_normalization=sigmoid,
                             tile_rows=tile_rows))
        ref = jax.block_until_ready(
            dice_loss_ref(x, t.astype(jnp.float32),
                          sigmoid_normalization=sigmoid))
        assert np.allclose(np.asarray(loss), np.asarray(ref),
                           rtol=1e-5, atol=1e-5), (
            f"shape={shape} sigmoid={sigmoid}: pallas={loss} ref={ref}")

    # Primary small shape implied by the module: (B, C, H, W) = (2, 4, 16, 16);
    # bf16 target (exact 0/1) exercises the narrowed HBM target stream.
    run_case(0, (2, 4, 16, 16), sigmoid=True, target_dtype=jnp.bfloat16)
    # Sublane-packed (C, 8, 128) accumulators + row-block split (B == 1).
    run_case(1, (1, 3, 64, 64), sigmoid=True, tile_rows=8)
    # Masked partial last row-block (R = 30 not a multiple of tile_rows = 8).
    run_case(2, (1, 2, 60, 64), sigmoid=True, tile_rows=8)
    # Softmax(dim=1) normalization + ragged tail (N = 272 -> 16-element tail).
    run_case(3, (2, 4, 16, 17), sigmoid=False)

    print("KERNEL_OK")
</pallas_src>

<mosaic_0001>
module attributes {stable_mosaic.version = 11 : i64} {
  func.func @_dice_partial_kernel(%arg0: i32, %arg1: i32, %arg2: i32, %arg3: memref<1x4x2x128xf32, #tpu.memory_space<vmem>>, %arg4: memref<1x4x2x128xbf16, #tpu.memory_space<vmem>>, %arg5: memref<1x1x4x1x128xf32, #tpu.memory_space<vmem>>, %arg6: memref<1x1x4x1x128xf32, #tpu.memory_space<vmem>>) attributes {dimension_semantics = [#tpu.dimension_semantics<parallel>, #tpu.dimension_semantics<parallel>, #tpu.dimension_semantics<arbitrary>], iteration_bounds = array<i64: 2, 1, 1>, scalar_prefetch = 0 : i64, scratch_operands = 0 : i64, tpu.core_type = #tpu.core_type<tc>, window_params = [{transform_indices = @transform_0, window_bounds = array<i64: 1, 4, 2, 128>}, {transform_indices = @transform_1, window_bounds = array<i64: 1, 4, 2, 128>}, {transform_indices = @transform_2, window_bounds = array<i64: 1, 1, 4, 1, 128>}, {transform_indices = @transform_3, window_bounds = array<i64: 1, 1, 4, 1, 128>}]} {
    %c0_i32 = arith.constant 0 : i32
    %0 = arith.cmpi eq, %arg2, %c0_i32 : i32
    %1 = arith.extui %0 : i1 to i32
    %c0_i32_0 = arith.constant 0 : i32
    %2 = arith.cmpi ne, %1, %c0_i32_0 : i32
    scf.if %2 {
      %cst_30 = arith.constant 0.000000e+00 : f32
      %33 = vector.broadcast %cst_30 : f32 to vector<1x1x4x1x128xf32>
      %c0_31 = arith.constant 0 : index
      %c0_32 = arith.constant 0 : index
      %c0_33 = arith.constant 0 : index
      %c0_34 = arith.constant 0 : index
      %c0_35 = arith.constant 0 : index
      %34 = vector.load %arg5[%c0_31, %c0_32, %c0_33, %c0_34, %c0_35] : memref<1x1x4x1x128xf32, #tpu.memory_space<vmem>>, vector<1x1x4x1x128xf32>
      tpu.vector_store %arg5[%c0_31, %c0_32, %c0_33, %c0_34, %c0_35], %33 {strides = array<i32>} : memref<1x1x4x1x128xf32, #tpu.memory_space<vmem>>, vector<1x1x4x1x128xf32>,
      %cst_36 = arith.constant 0.000000e+00 : f32
      %35 = vector.broadcast %cst_36 : f32 to vector<1x1x4x1x128xf32>
      %c0_37 = arith.constant 0 : index
      %c0_38 = arith.constant 0 : index
      %c0_39 = arith.constant 0 : index
      %c0_40 = arith.constant 0 : index
      %c0_41 = arith.constant 0 : index
      %36 = vector.load %arg6[%c0_37, %c0_38, %c0_39, %c0_40, %c0_41] : memref<1x1x4x1x128xf32, #tpu.memory_space<vmem>>, vector<1x1x4x1x128xf32>
      tpu.vector_store %arg6[%c0_37, %c0_38, %c0_39, %c0_40, %c0_41], %35 {strides = array<i32>} : memref<1x1x4x1x128xf32, #tpu.memory_space<vmem>>, vector<1x1x4x1x128xf32>,
    } else {
    }
    %c0 = arith.constant 0 : index
    %c0_1 = arith.constant 0 : index
    %c0_2 = arith.constant 0 : index
    %c0_3 = arith.constant 0 : index
    %3 = vector.load %arg3[%c0, %c0_1, %c0_2, %c0_3] : memref<1x4x2x128xf32, #tpu.memory_space<vmem>>, vector<1x4x2x128xf32>
    %4 = vector.shape_cast %3 : vector<1x4x2x128xf32> to vector<4x2x128xf32>
    %c0_4 = arith.constant 0 : index
    %c0_5 = arith.constant 0 : index
    %c0_6 = arith.constant 0 : index
    %c0_7 = arith.constant 0 : index
    %5 = vector.load %arg4[%c0_4, %c0_5, %c0_6, %c0_7] : memref<1x4x2x128xbf16, #tpu.memory_space<vmem>>, vector<1x4x2x128xbf16>
    %6 = vector.shape_cast %5 : vector<1x4x2x128xbf16> to vector<4x2x128xbf16>
    %7 = arith.extf %6 : vector<4x2x128xbf16> to vector<4x2x128xf32>
    %8 = arith.negf %4 : vector<4x2x128xf32>
    %9 = math.exp %8 : vector<4x2x128xf32>
    %cst = arith.constant 1.000000e+00 : f32
    %10 = vector.broadcast %cst : f32 to vector<4x2x128xf32>
    %11 = arith.addf %10, %9 : vector<4x2x128xf32>
    %12 = arith.divf %10, %11 : vector<4x2x128xf32>
    %13 = arith.mulf %12, %7 : vector<4x2x128xf32>
    %14 = arith.mulf %12, %12 : vector<4x2x128xf32>
    %15 = arith.mulf %7, %7 : vector<4x2x128xf32>
    %16 = arith.addf %14, %15 : vector<4x2x128xf32>
    %c0_8 = arith.constant 0 : index
    %c0_9 = arith.constant 0 : index
    %c0_10 = arith.constant 0 : index
    %c0_11 = arith.constant 0 : index
    %c0_12 = arith.constant 0 : index
    %17 = vector.load %arg5[%c0_8, %c0_9, %c0_10, %c0_11, %c0_12] : memref<1x1x4x1x128xf32, #tpu.memory_space<vmem>>, vector<1x1x4x1x128xf32>
    %18 = vector.shape_cast %17 : vector<1x1x4x1x128xf32> to vector<4x1x128xf32>
    %cst_13 = arith.constant dense<0.000000e+00> : vector<4x128xf32>
    %19 = vector.multi_reduction <add>, %13, %cst_13 [1] : vector<4x2x128xf32> to vector<4x128xf32>
    %20 = vector.shape_cast %19 : vector<4x128xf32> to vector<4x1x128xf32>
    %21 = arith.addf %18, %20 : vector<4x1x128xf32>
    %c0_14 = arith.constant 0 : index
    %c0_15 = arith.constant 0 : index
    %c0_16 = arith.constant 0 : index
    %c0_17 = arith.constant 0 : index
    %c0_18 = arith.constant 0 : index
    %22 = vector.load %arg5[%c0_14, %c0_15, %c0_16, %c0_17, %c0_18] : memref<1x1x4x1x128xf32, #tpu.memory_space<vmem>>, vector<1x1x4x1x128xf32>
    %23 = vector.shape_cast %22 : vector<1x1x4x1x128xf32> to vector<4x1x128xf32>
    %24 = vector.shape_cast %21 : vector<4x1x128xf32> to vector<1x1x4x1x128xf32>
    tpu.vector_store %arg5[%c0_14, %c0_15, %c0_16, %c0_17, %c0_18], %24 {strides = array<i32>} : memref<1x1x4x1x128xf32, #tpu.memory_space<vmem>>, vector<1x1x4x1x128xf32>,
    %c0_19 = arith.constant 0 : index
    %c0_20 = arith.constant 0 : index
    %c0_21 = arith.constant 0 : index
    %c0_22 = arith.constant 0 : index
    %c0_23 = arith.constant 0 : index
    %25 = vector.load %arg6[%c0_19, %c0_20, %c0_21, %c0_22, %c0_23] : memref<1x1x4x1x128xf32, #tpu.memory_space<vmem>>, vector<1x1x4x1x128xf32>
    %26 = vector.shape_cast %25 : vector<1x1x4x1x128xf32> to vector<4x1x128xf32>
    %cst_24 = arith.constant dense<0.000000e+00> : vector<4x128xf32>
    %27 = vector.multi_reduction <add>, %16, %cst_24 [1] : vector<4x2x128xf32> to vector<4x128xf32>
    %28 = vector.shape_cast %27 : vector<4x128xf32> to vector<4x1x128xf32>
    %29 = arith.addf %26, %28 : vector<4x1x128xf32>
    %c0_25 = arith.constant 0 : index
    %c0_26 = arith.constant 0 : index
    %c0_27 = arith.constant 0 : index
    %c0_28 = arith.constant 0 : index
    %c0_29 = arith.constant 0 : index
    %30 = vector.load %arg6[%c0_25, %c0_26, %c0_27, %c0_28, %c0_29] : memref<1x1x4x1x128xf32, #tpu.memory_space<vmem>>, vector<1x1x4x1x128xf32>
    %31 = vector.shape_cast %30 : vector<1x1x4x1x128xf32> to vector<4x1x128xf32>
    %32 = vector.shape_cast %29 : vector<4x1x128xf32> to vector<1x1x4x1x128xf32>
    tpu.vector_store %arg6[%c0_25, %c0_26, %c0_27, %c0_28, %c0_29], %32 {strides = array<i32>} : memref<1x1x4x1x128xf32, #tpu.memory_space<vmem>>, vector<1x1x4x1x128xf32>,
    return
  }
  func.func @transform_0(%arg0: i32, %arg1: i32, %arg2: i32) -> (i32, i32, i32, i32) {
    %c1_i32 = arith.constant 1 : i32
    %0 = arith.muli %arg1, %c1_i32 : i32
    %1 = arith.addi %0, %arg2 : i32
    %c0_i32 = arith.constant 0 : i32
    %c0_i32_0 = arith.constant 0 : i32
    %c0_i32_1 = arith.constant 0 : i32
    return %arg0, %c0_i32, %1, %c0_i32_0 : i32, i32, i32, i32
  }
  func.func @transform_1(%arg0: i32, %arg1: i32, %arg2: i32) -> (i32, i32, i32, i32) {
    %c1_i32 = arith.constant 1 : i32
    %0 = arith.muli %arg1, %c1_i32 : i32
    %1 = arith.addi %0, %arg2 : i32
    %c0_i32 = arith.constant 0 : i32
    %c0_i32_0 = arith.constant 0 : i32
    %c0_i32_1 = arith.constant 0 : i32
    return %arg0, %c0_i32, %1, %c0_i32_0 : i32, i32, i32, i32
  }
  func.func @transform_2(%arg0: i32, %arg1: i32, %arg2: i32) -> (i32, i32, i32, i32, i32) {
    %c0_i32 = arith.constant 0 : i32
    %c0_i32_0 = arith.constant 0 : i32
    %c0_i32_1 = arith.constant 0 : i32
    %c0_i32_2 = arith.constant 0 : i32
    return %arg0, %arg1, %c0_i32, %c0_i32_0, %c0_i32_1 : i32, i32, i32, i32, i32
  }
  func.func @transform_3(%arg0: i32, %arg1: i32, %arg2: i32) -> (i32, i32, i32, i32, i32) {
    %c0_i32 = arith.constant 0 : i32
    %c0_i32_0 = arith.constant 0 : i32
    %c0_i32_1 = arith.constant 0 : i32
    %c0_i32_2 = arith.constant 0 : i32
    return %arg0, %arg1, %c0_i32, %c0_i32_0, %c0_i32_1 : i32, i32, i32, i32, i32
  }
}

</mosaic_0001>

<llo_original>
// kernel: tpu_custom_call.1
$region0: #{tpu_custom_call.1}
  #allocation0 [shape = 'u32[]', space=smem, size = 0x4, offset = 0x4, fixed_abs, tag = 'smem constant byte address 0x4 - core index']
  #allocation1 [shape = 'u32[144,128]{1,0:T(1,128)}', space=vmem, size = 0x12000, scoped, tag = 'internal scratch']
  %s0 = inlined_call_operand.hbm [shape: f32[2,4,2,128], index: 0, kind: input, shape index: {}]
  %s1 = inlined_call_operand.hbm [shape: bf16[2,4,2,128], index: 1, kind: input, shape index: {}]
  %s2 = inlined_call_operand.hbm [shape: f32[2,1,4,1,128], index: 2, kind: output, shape index: {0}]
  %s3 = inlined_call_operand.hbm [shape: f32[2,1,4,1,128], index: 3, kind: output, shape index: {1}]
  %4 = xla_tuple %s2, %s3
  %s5 = sld [smem:[#allocation0]]
  $region61: #{tpu_custom_call.1} parent=0
    _
  %s7 = ssub.s32 1, %s5
  %s8 = scalar_select 0, %s7, %s5
  $region1: #{tpu_custom_call.1} parent=0
    #allocation2 [shape = 'u8[8192]{0}', space=vmem, size = 0x2000, scoped, tag = 'input window, operand 0']
    #allocation3 [shape = 's32[2]{0}', space=sflag, size = 0x8, scoped, tag = 'scoped memory for tpu_custom_call.1']
    #allocation4 [shape = 's32[2]{0}', space=sflag, size = 0x8, scoped, tag = 'scoped memory for tpu_custom_call.1']
    #allocation5 [shape = 'u8[4096]{0}', space=vmem, size = 0x1000, scoped, tag = 'input window, operand 1']
    #allocation6 [shape = 's32[2]{0}', space=sflag, size = 0x8, scoped, tag = 'scoped memory for tpu_custom_call.1']
    #allocation7 [shape = 'u8[4096]{0}', space=vmem, size = 0x1000, scoped, tag = 'output window, operand 0']
    #allocation8 [shape = 'u8[4096]{0}', space=vmem, size = 0x1000, scoped, tag = 'output window, operand 1']
    #allocation9 [shape = 's32[2]{0}', space=sflag, size = 0x8, scoped, tag = 'scoped memory for tpu_custom_call.1']
    %9 = vsyncpa [#allocation3], 0
    %s10 = scalar_lea.sflag [#allocation3], 1
    %11 = vsyncpa %s10, 0
    %12 = vsyncpa [#allocation6], 0
    %s13 = scalar_lea.sflag [#allocation6], 1
    %14 = vsyncpa %s13, 0
    %15 = vsyncpa [#allocation4], 0
    %s16 = scalar_lea.sflag [#allocation4], 1
    %17 = vsyncpa %s16, 0
    %18 = vsyncpa [#allocation9], 0
    %s19 = scalar_lea.sflag [#allocation9], 1
    %20 = vsyncpa %s19, 0
    loop: start=0, step=1, limit=4
    $region2: #{tpu_custom_call.1} parent=1 // loop_pre_header
      _
    $region3: #{tpu_custom_call.1} parent=1 // loop_header
      %s22 = sphi 0, %s26
      %p23 = scmp.ge.s32.totalorder %s22, 4
      %s29 = sphi 0, %s48
      %s30 = sphi 0, %s44
      %s31 = sphi 0, %s40
      %s32 = sphi 0, %s29
      %s33 = sphi 0, %s30
      %s34 = sphi 0, %s31
      %s35 = sphi 0, %s32
      %s36 = sphi 0, %s33
      %s37 = sphi 0, %s34
      %s55 = sphi 0, %s57
      %s58 = sphi 0, %s55
      %s59 = sphi 0, %s58
      %s75 = sphi 0, %s59
      %s85 = sphi 0, %s87
      %s88 = sphi 0, %s85
      %s89 = sphi 0, %s88
      %s105 = sphi 0, %s89
      %s113 = sphi 0, %s115
      %s116 = sphi 0, %s113
      %s117 = sphi 0, %s116
      %s133 = sphi 0, %s117
      %s141 = sphi 0, %s143
      %s144 = sphi 0, %s141
      %s145 = sphi 0, %s144
      %s161 = sphi 0, %s145
    $region4: #{tpu_custom_call.1} parent=1 // loop_header_branch
      %25 = sbr.rel (%p23) target = $region8
    $region5: #{tpu_custom_call.1} parent=1 // loop_body
      %s27 = ssub.s32 %s22, 1
      %s28 = ssub.s32 %s22, 2
      %s38 = sadd.s32 1, %s31
      %p39 = scmp.ge.s32.totalorder %s38, 1
      %s40 = scalar_select %p39, 0, %s38
      %s41 = sadd.s32 1, %s30
      %s42 = scalar_select %p39, %s41, %s30
      %p43 = scmp.ge.s32.totalorder %s42, 1
      %s44 = scalar_select %p43, 0, %s42
      %s45 = sadd.s32 1, %s29
      %s46 = scalar_select %p43, %s45, %s29
      %p47 = scmp.ge.s32.totalorder %s46, 2
      %s48 = scalar_select %p47, 0, %s46
      %s49 = sadd.s32 %s30, %s31
      %s50 = sadd.s32 %s44, %s40
      %s51 = ssub.s32 %s29, %s48
      %s52 = ssub.s32 %s49, %s50
      %s53 = sor.u32 %s51, %s52
      %p54 = scmp.eq.s32.totalorder %s53, 0
      %s56 = sadd.s32 %s55, 1
      %s57 = scalar_select %p54, %s55, %s56
      %p60 = pneg %p54
      %p61 = scmp.eq.s32.totalorder %s22, 1
      %p62 = por %p60, %p61
      %p63 = scmp.ne.s32.totalorder %s55, %s58
      %p64 = scmp.eq.s32.totalorder %s22, 0
      %p65 = por %p63, %p64
      %p66 = scmp.ne.s32.totalorder %s55, %s58
      %p67 = scmp.eq.s32.totalorder %s27, 1
      %p68 = por %p66, %p67
      %p69 = scmp.ne.s32.totalorder %s58, %s59
      %p70 = scmp.eq.s32.totalorder %s27, 0
      %p71 = por %p69, %p70
      %p72 = scmp.ne.s32.totalorder %s58, %s59
      %p73 = scmp.eq.s32.totalorder %s28, 1
      %p74 = por %p72, %p73
      %p76 = scmp.ne.s32.totalorder %s59, %s75
      %p77 = scmp.eq.s32.totalorder %s28, 0
      %p78 = por %p76, %p77
      %s79 = sadd.s32 %s30, %s31
      %s80 = sadd.s32 %s44, %s40
      %s81 = ssub.s32 %s29, %s48
      %s82 = ssub.s32 %s79, %s80
      %s83 = sor.u32 %s81, %s82
      %p84 = scmp.eq.s32.totalorder %s83, 0
      %s86 = sadd.s32 %s85, 1
      %s87 = scalar_select %p84, %s85, %s86
      %p90 = pneg %p84
      %p91 = scmp.eq.s32.totalorder %s22, 1
      %p92 = por %p90, %p91
      %p93 = scmp.ne.s32.totalorder %s85, %s88
      %p94 = scmp.eq.s32.totalorder %s22, 0
      %p95 = por %p93, %p94
      %p96 = scmp.ne.s32.totalorder %s85, %s88
      %p97 = scmp.eq.s32.totalorder %s27, 1
      %p98 = por %p96, %p97
      %p99 = scmp.ne.s32.totalorder %s88, %s89
      %p100 = scmp.eq.s32.totalorder %s27, 0
      %p101 = por %p99, %p100
      %p102 = scmp.ne.s32.totalorder %s88, %s89
      %p103 = scmp.eq.s32.totalorder %s28, 1
      %p104 = por %p102, %p103
      %p106 = scmp.ne.s32.totalorder %s89, %s105
      %p107 = scmp.eq.s32.totalorder %s28, 0
      %p108 = por %p106, %p107
      %s109 = ssub.s32 %s29, %s48
      %s110 = ssub.s32 %s30, %s44
      %s111 = sor.u32 %s109, %s110
      %p112 = scmp.eq.s32.totalorder %s111, 0
      %s114 = sadd.s32 %s113, 1
      %s115 = scalar_select %p112, %s113, %s114
      %p118 = pneg %p112
      %p119 = scmp.eq.s32.totalorder %s22, 1
      %p120 = por %p118, %p119
      %p121 = scmp.ne.s32.totalorder %s113, %s116
      %p122 = scmp.eq.s32.totalorder %s22, 0
      %p123 = por %p121, %p122
      %p124 = scmp.ne.s32.totalorder %s113, %s116
      %p125 = scmp.eq.s32.totalorder %s27, 1
      %p126 = por %p124, %p125
      %p127 = scmp.ne.s32.totalorder %s116, %s117
      %p128 = scmp.eq.s32.totalorder %s27, 0
      %p129 = por %p127, %p128
      %p130 = scmp.ne.s32.totalorder %s116, %s117
      %p131 = scmp.eq.s32.totalorder %s28, 1
      %p132 = por %p130, %p131
      %p134 = scmp.ne.s32.totalorder %s117, %s133
      %p135 = scmp.eq.s32.totalorder %s28, 0
      %p136 = por %p134, %p135
      %s137 = ssub.s32 %s29, %s48
      %s138 = ssub.s32 %s30, %s44
      %s139 = sor.u32 %s137, %s138
      %p140 = scmp.eq.s32.totalorder %s139, 0
      %s142 = sadd.s32 %s141, 1
      %s143 = scalar_select %p140, %s141, %s142
      %p146 = pneg %p140
      %p147 = scmp.eq.s32.totalorder %s22, 1
      %p148 = por %p146, %p147
      %p149 = scmp.ne.s32.totalorder %s141, %s144
      %p150 = scmp.eq.s32.totalorder %s22, 0
      %p151 = por %p149, %p150
      %p152 = scmp.ne.s32.totalorder %s141, %s144
      %p153 = scmp.eq.s32.totalorder %s27, 1
      %p154 = por %p152, %p153
      %p155 = scmp.ne.s32.totalorder %s144, %s145
      %p156 = scmp.eq.s32.totalorder %s27, 0
      %p157 = por %p155, %p156
      %p158 = scmp.ne.s32.totalorder %s144, %s145
      %p159 = scmp.eq.s32.totalorder %s28, 1
      %p160 = por %p158, %p159
      %p162 = scmp.ne.s32.totalorder %s145, %s161
      %p163 = scmp.eq.s32.totalorder %s28, 0
      %p164 = por %p162, %p163
      %p165 = scmp.le.s32.totalorder 1, %s22
      %p166 = scmp.lt.s32.totalorder %s22, 3
      %p167 = pnand %p165, %p166
      %p168 = pneg %p167
      // Predicated region
      $region9: #{tpu_custom_call.1} parent=5 // pred_check
        _
      $region10: #{tpu_custom_call.1} parent=5 // pred_check_branch
        %170 = sbr.rel (%p167) target = $region12
      $region11: #{tpu_custom_call.1} parent=5 // pred_region
        %s171 = ssub.s32 %s22, 1
      $region12: #{tpu_custom_call.1} parent=5 // pred_fallthru
        _
      %p172 = scmp.lt.s32.totalorder %s22, 2
      // Predicated region
      $region13: #{tpu_custom_call.1} parent=5 // pred_check
        %p173 = pneg %p172
      $region14: #{tpu_custom_call.1} parent=5 // pred_check_branch
        %175 = sbr.rel (%p173) target = $region16
      $region15: #{tpu_custom_call.1} parent=5 // pred_region
        // Predicated region
        $region17: #{tpu_custom_call.1} parent=15 // pred_check
          %p176 = pneg %p65
        $region18: #{tpu_custom_call.1} parent=15 // pred_check_branch
          %178 = sbr.rel (%p176) target = $region20
        $region19: #{tpu_custom_call.1} parent=15 // pred_region
          %s179 = sand.u32 %s55, 1
          %s180 = scalar_lea.sflag [#allocation3], %s179
          %s181 = sand.u32 %s55, 1
          %s182 = smul.addr %s181, 8
          %s183 = scalar_lea.vmem [#allocation2], %s182
          %s184 = sadd.s32 %s30, %s31
          %s186 = ssub.s32 128, 128
          %187 = vsyncadd %s180, %s186
          %s188 = smul.addr %s29, 4
          %s189 = sadd.s32 %s184, %s188
          %s190 = smul.addr %s189, 32
          %s191 = scalar_lea.hbm %s0, %s190
          %s192 = sshll.u32 %s183, 4
          %s193 = int_to_ptr.vmem [resolvable:$true] %s192
          %198 = dma.hbm_to_vmem [thread:$0]  %s191, 128, %s193, %s180, 32, 32, 2
        $region20: #{tpu_custom_call.1} parent=15 // pred_fallthru
          _
        // Predicated region
        $region21: #{tpu_custom_call.1} parent=15 // pred_check
          %p199 = pneg %p95
        $region22: #{tpu_custom_call.1} parent=15 // pred_check_branch
          %201 = sbr.rel (%p199) target = $region24
        $region23: #{tpu_custom_call.1} parent=15 // pred_region
          %s202 = sand.u32 %s85, 1
          %s203 = scalar_lea.sflag [#allocation6], %s202
          %s204 = sand.u32 %s85, 1
          %s205 = smul.addr %s204, 4
          %s206 = scalar_lea.vmem [#allocation5], %s205
          %s207 = sadd.s32 %s30, %s31
          %s209 = ssub.s32 64, 64
          %210 = vsyncadd %s203, %s209
          %s211 = smul.addr %s29, 4
          %s212 = sadd.s32 %s207, %s211
          %s213 = smul.addr %s212, 16
          %s214 = scalar_lea.hbm %s1, %s213
          %s215 = sshll.u32 %s206, 4
          %s216 = int_to_ptr.vmem [resolvable:$true] %s215
          %221 = dma.hbm_to_vmem [thread:$0]  %s214, 64, %s216, %s203, 16, 16, 1
        $region24: #{tpu_custom_call.1} parent=15 // pred_fallthru
          _
      $region16: #{tpu_custom_call.1} parent=5 // pred_fallthru
        _
      %p222 = scmp.le.s32.totalorder 1, %s22
      %p223 = scmp.lt.s32.totalorder %s22, 3
      %p224 = pnand %p222, %p223
      %p225 = pneg %p224
      // Predicated region
      $region25: #{tpu_custom_call.1} parent=5 // pred_check
        _
      $region26: #{tpu_custom_call.1} parent=5 // pred_check_branch
        %227 = sbr.rel (%p224) target = $region28
      $region27: #{tpu_custom_call.1} parent=5 // pred_region
        %s228 = ssub.s32 %s22, 1
        %s229 = sand.u32 %s58, 1
        %s230 = scalar_lea.sflag [#allocation3], %s229
        %s231 = sand.u32 %s58, 1
        %s232 = smul.addr %s231, 8
        %s233 = scalar_lea.vmem [#allocation2], %s232
        // Predicated region
        $region29: #{tpu_custom_call.1} parent=27 // pred_check
          %p234 = pneg %p71
        $region30: #{tpu_custom_call.1} parent=27 // pred_check_branch
          %236 = sbr.rel (%p234) target = $region32
        $region31: #{tpu_custom_call.1} parent=27 // pred_region
          %237 = dma.done %s230, 128
        $region32: #{tpu_custom_call.1} parent=27 // pred_fallthru
          _
        %s238 = sand.u32 %s88, 1
        %s239 = scalar_lea.sflag [#allocation6], %s238
        %s240 = sand.u32 %s88, 1
        %s241 = smul.addr %s240, 4
        %s242 = scalar_lea.vmem [#allocation5], %s241
        // Predicated region
        $region33: #{tpu_custom_call.1} parent=27 // pred_check
          %p243 = pneg %p101
        $region34: #{tpu_custom_call.1} parent=27 // pred_check_branch
          %245 = sbr.rel (%p243) target = $region36
        $region35: #{tpu_custom_call.1} parent=27 // pred_region
          %246 = dma.done %s239, 64
        $region36: #{tpu_custom_call.1} parent=27 // pred_fallthru
          _
        %s247 = sand.u32 %s58, 1
        %s248 = scalar_lea.sflag [#allocation3], %s247
        %s249 = sand.u32 %s58, 1
        %s250 = smul.addr %s249, 8
        %s251 = scalar_lea.vmem [#allocation2], %s250
        %p252 = pneg %p71
        %p253 = pneg %p68
        %s254 = sand.u32 %s88, 1
        %s255 = scalar_lea.sflag [#allocation6], %s254
        %s256 = sand.u32 %s88, 1
        %s257 = smul.addr %s256, 4
        %s258 = scalar_lea.vmem [#allocation5], %s257
        %p259 = pneg %p101
        %p260 = pneg %p98
        %p261 = pneg %p129
        %p262 = pneg %p126
        %s263 = sand.u32 %s116, 1
        %s264 = scalar_lea.sflag [#allocation4], %s263
        %s265 = sand.u32 %s116, 1
        %s266 = smul.addr %s265, 4
        %s267 = scalar_lea.vmem [#allocation7], %s266
        %p268 = pneg %p157
        %p269 = pneg %p154
        %s270 = sand.u32 %s144, 1
        %s271 = scalar_lea.sflag [#allocation9], %s270
        %s272 = sand.u32 %s144, 1
        %s273 = smul.addr %s272, 4
        %s274 = scalar_lea.vmem [#allocation8], %s273
        %s275 = sadd.s32 %s33, %s34
        %s276 = sadd.s32 %s33, %s34
        %p277 = scmp.eq.s32.totalorder %s34, 0
        // Predicated region
        $region37: #{tpu_custom_call.1} parent=27 // pred_check
          %p278 = pneg %p277
        $region38: #{tpu_custom_call.1} parent=27 // pred_check_branch
          %280 = sbr.rel (%p278) target = $region40
        $region39: #{tpu_custom_call.1} parent=27 // pred_region
          %281 = vst [vmem:[%s267] sm:$0x1] 0.0
          %282 = vst [vmem:[%s267 + $0x1] sm:$0x1] 0.0
          %283 = vst [vmem:[%s267 + $0x2] sm:$0x1] 0.0
          %284 = vst [vmem:[%s267 + $0x3] sm:$0x1] 0.0
          %285 = vst [vmem:[%s274] sm:$0x1] 0.0
          %286 = vst [vmem:[%s274 + $0x1] sm:$0x1] 0.0
          %287 = vst [vmem:[%s274 + $0x2] sm:$0x1] 0.0
          %288 = vst [vmem:[%s274 + $0x3] sm:$0x1] 0.0
        $region40: #{tpu_custom_call.1} parent=27 // pred_fallthru
          _
        %v289 = vld [vmem:[%s233] sm:$0x3]
        %v290 = vld [vmem:[%s233 + $0x2] sm:$0x3]
        %v291 = vld [vmem:[%s233 + $0x4] sm:$0x3]
        %v292 = vld [vmem:[%s233 + $0x6] sm:$0x3]
        %v293 = vld [vmem:[%s242] sm:$0x1]
        %v294 = vld [vmem:[%s242 + $0x1] sm:$0x1]
        %v295 = vld [vmem:[%s242 + $0x2] sm:$0x1]
        %v296 = vld [vmem:[%s242 + $0x3] sm:$0x1]
        %v297 = vunpack.c.l.bf16 %v293
        %v298 = vunpack.c.l.bf16 %v294
        %v299 = vunpack.c.l.bf16 %v295
        %v300 = vunpack.c.l.bf16 %v296
        %v301 = vxor.u32 %v289, 2147483648
        %v302 = vxor.u32 %v290, 2147483648
        %v303 = vxor.u32 %v291, 2147483648
        %v304 = vxor.u32 %v292, 2147483648
        %v305 = vmul.f32 %v301, 1.442695
        %v306 = vpow.pop %v305
        %v307 = vmul.f32 %v302, 1.442695
        %v308 = vpow.pop %v307
        %v309 = vmul.f32 %v303, 1.442695
        %v310 = vpow.pop %v309
        %v311 = vmul.f32 %v304, 1.442695
        %v312 = vpow.pop %v311
        %v313 = vadd.f32 %v306, 1.0
        %v314 = vadd.f32 %v308, 1.0
        %v315 = vadd.f32 %v310, 1.0
        %v316 = vadd.f32 %v312, 1.0
        %v317 = vrcp.pop %v313
        %v318 = vmul.f32 1.0, %v317
        %v319 = vrcp.pop %v314
        %v320 = vmul.f32 1.0, %v319
        %v321 = vrcp.pop %v315
        %v322 = vmul.f32 1.0, %v321
        %v323 = vrcp.pop %v316
        %v324 = vmul.f32 1.0, %v323
        %v325 = vmul.f32 %v318, %v297
        %v326 = vmul.f32 %v320, %v298
        %v327 = vmul.f32 %v322, %v299
        %v328 = vmul.f32 %v324, %v300
        %v329 = vmul.f32 %v318, %v318
        %v330 = vmul.f32 %v320, %v320
        %v331 = vmul.f32 %v322, %v322
        %v332 = vmul.f32 %v324, %v324
        %v333 = vmul.f32 %v297, %v297
        %v334 = vmul.f32 %v298, %v298
        %v335 = vmul.f32 %v299, %v299
        %v336 = vmul.f32 %v300, %v300
        %v337 = vadd.f32 %v329, %v333
        %v338 = vadd.f32 %v330, %v334
        %v339 = vadd.f32 %v331, %v335
        %v340 = vadd.f32 %v332, %v336
        %v341 = vld [vmem:[%s267] sm:$0x1]
        %v342 = vld [vmem:[%s267 + $0x1] sm:$0x1]
        %v343 = vld [vmem:[%s267 + $0x2] sm:$0x1]
        %v344 = vld [vmem:[%s267 + $0x3] sm:$0x1]
        %vm345 = vcmask 1041408
        %v346 = vsel %vm345, %v325, 0.0
        %v347 = vrot.slane %v346, 4
        %v348 = vadd.f32 %v346, %v347
        %v349 = vrot.slane %v348, 2
        %v350 = vadd.f32 %v348, %v349
        %v351 = vrot.slane %v350, 1
        %v352 = vadd.f32 %v350, %v351
        %v353 = vsel %vm345, %v326, 0.0
        %v354 = vrot.slane %v353, 4
        %v355 = vadd.f32 %v353, %v354
        %v356 = vrot.slane %v355, 2
        %v357 = vadd.f32 %v355, %v356
        %v358 = vrot.slane %v357, 1
        %v359 = vadd.f32 %v357, %v358
        %v360 = vsel %vm345, %v327, 0.0
        %v361 = vrot.slane %v360, 4
        %v362 = vadd.f32 %v360, %v361
        %v363 = vrot.slane %v362, 2
        %v364 = vadd.f32 %v362, %v363
        %v365 = vrot.slane %v364, 1
        %v366 = vadd.f32 %v364, %v365
        %v367 = vsel %vm345, %v328, 0.0
        %v368 = vrot.slane %v367, 4
        %v369 = vadd.f32 %v367, %v368
        %v370 = vrot.slane %v369, 2
        %v371 = vadd.f32 %v369, %v370
        %v372 = vrot.slane %v371, 1
        %v373 = vadd.f32 %v371, %v372
        %v374 = vadd.f32 %v341, %v352
        %v375 = vadd.f32 %v342, %v359
        %v376 = vadd.f32 %v343, %v366
        %v377 = vadd.f32 %v344, %v373
        %378 = vst [vmem:[%s267] sm:$0x1] %v374
        %379 = vst [vmem:[%s267 + $0x1] sm:$0x1] %v375
        %380 = vst [vmem:[%s267 + $0x2] sm:$0x1] %v376
        %381 = vst [vmem:[%s267 + $0x3] sm:$0x1] %v377
        %v382 = vld [vmem:[%s274] sm:$0x1]
        %v383 = vld [vmem:[%s274 + $0x1] sm:$0x1]
        %v384 = vld [vmem:[%s274 + $0x2] sm:$0x1]
        %v385 = vld [vmem:[%s274 + $0x3] sm:$0x1]
        %v386 = vsel %vm345, %v337, 0.0
        %v387 = vrot.slane %v386, 4
        %v388 = vadd.f32 %v386, %v387
        %v389 = vrot.slane %v388, 2
        %v390 = vadd.f32 %v388, %v389
        %v391 = vrot.slane %v390, 1
        %v392 = vadd.f32 %v390, %v391
        %v393 = vsel %vm345, %v338, 0.0
        %v394 = vrot.slane %v393, 4
        %v395 = vadd.f32 %v393, %v394
        %v396 = vrot.slane %v395, 2
        %v397 = vadd.f32 %v395, %v396
        %v398 = vrot.slane %v397, 1
        %v399 = vadd.f32 %v397, %v398
        %v400 = vsel %vm345, %v339, 0.0
        %v401 = vrot.slane %v400, 4
        %v402 = vadd.f32 %v400, %v401
        %v403 = vrot.slane %v402, 2
        %v404 = vadd.f32 %v402, %v403
        %v405 = vrot.slane %v404, 1
        %v406 = vadd.f32 %v404, %v405
        %v407 = vsel %vm345, %v340, 0.0
        %v408 = vrot.slane %v407, 4
        %v409 = vadd.f32 %v407, %v408
        %v410 = vrot.slane %v409, 2
        %v411 = vadd.f32 %v409, %v410
        %v412 = vrot.slane %v411, 1
        %v413 = vadd.f32 %v411, %v412
        %v414 = vadd.f32 %v382, %v392
        %v415 = vadd.f32 %v383, %v399
        %v416 = vadd.f32 %v384, %v406
        %v417 = vadd.f32 %v385, %v413
        %418 = vst [vmem:[%s274] sm:$0x1] %v414
        %419 = vst [vmem:[%s274 + $0x1] sm:$0x1] %v415
        %420 = vst [vmem:[%s274 + $0x2] sm:$0x1] %v416
        %421 = vst [vmem:[%s274 + $0x3] sm:$0x1] %v417
        %s422 = sand.u32 %s116, 1
        %s423 = scalar_lea.sflag [#allocation4], %s422
        %s424 = sand.u32 %s116, 1
        %s425 = smul.addr %s424, 4
        %s426 = scalar_lea.vmem [#allocation7], %s425
        %s427 = sand.u32 %s144, 1
        %s428 = scalar_lea.sflag [#allocation9], %s427
        %s429 = sand.u32 %s144, 1
        %s430 = smul.addr %s429, 4
        %s431 = scalar_lea.vmem [#allocation8], %s430
        // Predicated region
        $region41: #{tpu_custom_call.1} parent=27 // pred_check
          %p432 = pneg %p126
        $region42: #{tpu_custom_call.1} parent=27 // pred_check_branch
          %434 = sbr.rel (%p432) target = $region44
        $region43: #{tpu_custom_call.1} parent=27 // pred_region
          %s436 = ssub.s32 64, 64
          %437 = vsyncadd %s423, %s436
          %s438 = smul.addr %s33, 4
          %s439 = smul.addr %s32, 4
          %s440 = sadd.s32 %s438, %s439
          %s441 = smul.addr %s440, 16
          %s442 = scalar_lea.hbm %s2, %s441
          %s443 = sshll.u32 %s426, 4
          %s444 = int_to_ptr.vmem [resolvable:$true] %s443
          %449 = dma.vmem_to_hbm [thread:$0]  %s444, 64, %s442, %s423, 16, 16, 1
        $region44: #{tpu_custom_call.1} parent=27 // pred_fallthru
          _
        // Predicated region
        $region45: #{tpu_custom_call.1} parent=27 // pred_check
          %p450 = pneg %p154
        $region46: #{tpu_custom_call.1} parent=27 // pred_check_branch
          %452 = sbr.rel (%p450) target = $region48
        $region47: #{tpu_custom_call.1} parent=27 // pred_region
          %s454 = ssub.s32 64, 64
          %455 = vsyncadd %s428, %s454
          %s456 = smul.addr %s33, 4
          %s457 = smul.addr %s32, 4
          %s458 = sadd.s32 %s456, %s457
          %s459 = smul.addr %s458, 16
          %s460 = scalar_lea.hbm %s3, %s459
          %s461 = sshll.u32 %s431, 4
          %s462 = int_to_ptr.vmem [resolvable:$true] %s461
          %467 = dma.vmem_to_hbm [thread:$0]  %s462, 64, %s460, %s428, 16, 16, 1
        $region48: #{tpu_custom_call.1} parent=27 // pred_fallthru
          _
      $region28: #{tpu_custom_call.1} parent=5 // pred_fallthru
        _
      %p468 = scmp.le.s32.totalorder 2, %s22
      // Predicated region
      $region49: #{tpu_custom_call.1} parent=5 // pred_check
        %p469 = pneg %p468
      $region50: #{tpu_custom_call.1} parent=5 // pred_check_branch
        %471 = sbr.rel (%p469) target = $region52
      $region51: #{tpu_custom_call.1} parent=5 // pred_region
        %s472 = ssub.s32 %s22, 2
        // Predicated region
        $region53: #{tpu_custom_call.1} parent=51 // pred_check
          %p473 = pneg %p132
        $region54: #{tpu_custom_call.1} parent=51 // pred_check_branch
          %475 = sbr.rel (%p473) target = $region56
        $region55: #{tpu_custom_call.1} parent=51 // pred_region
          %s476 = sand.u32 %s117, 1
          %s477 = scalar_lea.sflag [#allocation4], %s476
          %s478 = sand.u32 %s117, 1
          %s479 = smul.addr %s478, 4
          %s480 = scalar_lea.vmem [#allocation7], %s479
          %481 = dma.done %s477, 64
        $region56: #{tpu_custom_call.1} parent=51 // pred_fallthru
          _
        // Predicated region
        $region57: #{tpu_custom_call.1} parent=51 // pred_check
          %p482 = pneg %p160
        $region58: #{tpu_custom_call.1} parent=51 // pred_check_branch
          %484 = sbr.rel (%p482) target = $region60
        $region59: #{tpu_custom_call.1} parent=51 // pred_region
          %s485 = sand.u32 %s145, 1
          %s486 = scalar_lea.sflag [#allocation9], %s485
          %s487 = sand.u32 %s145, 1
          %s488 = smul.addr %s487, 4
          %s489 = scalar_lea.vmem [#allocation8], %s488
          %490 = dma.done %s486, 64
        $region60: #{tpu_custom_call.1} parent=51 // pred_fallthru
          _
      $region52: #{tpu_custom_call.1} parent=5 // pred_fallthru
        _
    $region6: #{tpu_custom_call.1} parent=1 // loop_footer
      %s26 = sadd.s32 1, %s22
    $region7: #{tpu_custom_call.1} parent=1 // loop_footer_branch
      %21 = sbr.rel target = $region3
    $region8: #{tpu_custom_call.1} parent=1 // loop_exit
      _
    %491 = vsyncpa [#allocation3], 1
    %s492 = scalar_lea.sflag [#allocation3], 1
    %493 = vsyncpa %s492, 1
    %494 = vsyncpa [#allocation6], 1
    %s495 = scalar_lea.sflag [#allocation6], 1
    %496 = vsyncpa %s495, 1
    %497 = vsyncpa [#allocation4], 1
    %s498 = scalar_lea.sflag [#allocation4], 1
    %499 = vsyncpa %s498, 1
    %500 = vsyncpa [#allocation9], 1
    %s501 = scalar_lea.sflag [#allocation9], 1
    %502 = vsyncpa %s501, 1

</llo_original>
